<compile_context>
chip_gen: v6e
topology: v6e:2x2x1
jax: 0.10.0
libtpu: 0.0.40
codegen_flags: <defaults>
</compile_context>

<pallas_src>
import jax
import jax.numpy as jnp
from jax.experimental import pallas as pl
from jax.experimental.pallas import tpu as pltpu


def _mm_stochastic_kernel(xt_ref, w1t_ref, b1t_ref, w2t_ref, b2t_ref, out_ref):
    # Transposed formulation (batch on lanes, features on sublanes):
    #   h^T = tanh(w1'^T @ x^T + b1')   -> (H, TB)   lane-dense, no padding
    #   y^T = w2'^T @ h^T + b2'         -> (Y, TB)   lane-dense, no padding
    # Normalizations are already folded into (w1', b1') and (w2', b2').
    h = jnp.tanh(
        jnp.dot(w1t_ref[...], xt_ref[...], preferred_element_type=jnp.float32)
        + b1t_ref[...]
    )
    y = (jnp.dot(w2t_ref[...], h, preferred_element_type=jnp.float32)
         + b2t_ref[...])
    out_ref[...] = y.astype(out_ref.dtype)


def _round_up(x, m):
    return ((x + m - 1) // m) * m


def _fold_params(params):
    """Fold the affine normalizers into the two linear layers (exact algebra)."""
    f32 = jnp.float32
    in_mean = jnp.concatenate(
        [params["x_mean"], params["noise_mean"]], axis=-1).astype(f32)      # (D,)
    in_std = jnp.concatenate(
        [params["x_std"], params["noise_std"]], axis=-1).astype(f32)        # (D,)
    w1 = params["w1"].astype(f32)                                           # (D, H)
    b1 = params["b1"].astype(f32)                                           # (H,)
    w2 = params["w2"].astype(f32)                                           # (H, Y)
    b2 = params["b2"].astype(f32)                                           # (Y,)
    y_mean = params["y_mean"].astype(f32)
    y_std = params["y_std"].astype(f32)

    # X_N.inverse / noise_N.inverse fused into one per-column affine, folded
    # into the first Linear; Y_N folded into the second Linear.
    w1f = in_std[:, None] * w1                                              # (D, H)
    b1f = b1 + in_mean @ w1                                                 # (H,)
    w2f = w2 / y_std[None, :]                                               # (H, Y)
    b2f = (b2 - y_mean) / y_std                                             # (Y,)
    return w1f, b1f, w2f, b2f


def mechanistic_model_stochastic(x_n, params, *, x_dim,
                                 tb_max=8192, min_pallas_batch=512,
                                 force_pallas=False):
    """Equivalent of MechanisticModelStochastic.forward_n (use_norm=True)."""
    assert params["x_mean"].shape[-1] == x_dim
    B, D = x_n.shape
    f32 = jnp.float32

    w1f, b1f, w2f, b2f = _fold_params(params)
    H = w1f.shape[1]
    Y = w2f.shape[1]

    # ---- Small-batch bypass -------------------------------------------------
    # Below ~one tile the pallas_call is pure custom-call / pipeline-prologue
    # overhead; plain XLA fusion of the folded MLP is strictly faster there.
    if B < min_pallas_batch and not force_pallas:
        h = jnp.tanh(x_n.astype(f32) @ w1f + b1f)
        return h @ w2f + b2f

    # ---- Transposed (batch-on-lanes) operands -------------------------------
    w1t = w1f.T                    # (H, D)  resident in VMEM
    b1t = b1f[:, None]             # (H, 1)
    w2t = w2f.T                    # (Y, H)
    b2t = b2f[:, None]             # (Y, 1)

    # Batch tile: multiple of 128 (lane dim), chosen so tiles divide the padded
    # batch near-evenly, and >= 2 tiles when possible (v7x: use both TCs).
    n_tiles = -(-B // tb_max)
    if B >= 256:
        n_tiles = max(n_tiles, 2)
    TB = _round_up(-(-B // n_tiles), 128)
    Bp = _round_up(B, TB)

    xT = x_n.astype(f32).T         # (D, B): batch on lanes, lane-dense tiles
    if Bp != B:
        xT = jnp.zeros((D, Bp), f32).at[:, :B].set(xT)

    grid = (Bp // TB,)

    # Un-padded cost numbers (honest hint for XLA's scheduler).
    cost = pl.CostEstimate(
        flops=2 * Bp * (D * H + H * Y),
        transcendentals=Bp * H,
        bytes_accessed=4 * (Bp * D + Bp * Y + H * D + H + Y * H + Y),
    )

    outT = pl.pallas_call(
        _mm_stochastic_kernel,
        out_shape=jax.ShapeDtypeStruct((Y, Bp), f32),
        grid=grid,
        in_specs=[
            pl.BlockSpec((D, TB), lambda i: (0, i)),   # x^T tile (streams over batch)
            pl.BlockSpec((H, D), lambda i: (0, 0)),    # w1'^T (resident)
            pl.BlockSpec((H, 1), lambda i: (0, 0)),    # b1'
            pl.BlockSpec((Y, H), lambda i: (0, 0)),    # w2'^T
            pl.BlockSpec((Y, 1), lambda i: (0, 0)),    # b2'
        ],
        out_specs=pl.BlockSpec((Y, TB), lambda i: (0, i)),
        compiler_params=pltpu.CompilerParams(
            # "parallel" lets the batch axis be sharded across TensorCores (v7x).
            dimension_semantics=("parallel",),
        ),
        cost_estimate=cost,
    )(xT, w1t, b1t, w2t, b2t)

    return outT[:, :B].T           # back to (B, Y)


def _reference(x_n, params, *, x_dim):
    """Pure-JAX reference mirroring the PyTorch forward_n line by line."""
    x = x_n[:, :x_dim] * params["x_std"] + params["x_mean"]
    noise = x_n[:, x_dim:] * params["noise_std"] + params["noise_mean"]
    full = jnp.concatenate([x, noise], axis=1)
    h = jnp.tanh(full @ params["w1"] + params["b1"])
    y = h @ params["w2"] + params["b2"]
    return (y - params["y_mean"]) / params["y_std"]


if __name__ == "__main__":
    # Shapes consistent with the module: x_n is (batch, x_dim + noise_dim)
    X_DIM = 16
    NOISE_DIM = 16
    D = X_DIM + NOISE_DIM
    HIDDEN = 32
    Y_DIM = 8

    key = jax.random.PRNGKey(0)
    keys = jax.random.split(key, 10)

    params = {
        # X_N / noise_N / Y_N are affine normalizers (mean, std); std kept positive.
        "x_mean": jax.random.normal(keys[0], (X_DIM,), jnp.float32),
        "x_std": 0.5 + jax.nn.softplus(jax.random.normal(keys[1], (X_DIM,), jnp.float32)),
        "noise_mean": jax.random.normal(keys[2], (NOISE_DIM,), jnp.float32),
        "noise_std": 0.5 + jax.nn.softplus(jax.random.normal(keys[3], (NOISE_DIM,), jnp.float32)),
        "y_mean": jax.random.normal(keys[4], (Y_DIM,), jnp.float32),
        "y_std": 0.5 + jax.nn.softplus(jax.random.normal(keys[5], (Y_DIM,), jnp.float32)),
        # Synthetic mechanistic model MM: Linear(D->H) -> tanh -> Linear(H->Y)
        "w1": jax.random.normal(keys[6], (D, HIDDEN), jnp.float32) * (1.0 / jnp.sqrt(D)),
        "b1": jax.random.normal(keys[7], (HIDDEN,), jnp.float32) * 0.1,
        "w2": jax.random.normal(keys[8], (HIDDEN, Y_DIM), jnp.float32) * (1.0 / jnp.sqrt(HIDDEN)),
        "b2": jax.random.normal(keys[9], (Y_DIM,), jnp.float32) * 0.1,
    }

    # 1) Pallas path, default settings: B=600 -> 2 grid steps of TB=384 (Bp=768).
    B1 = 600
    x1 = jax.random.normal(jax.random.PRNGKey(42), (B1, D), jnp.float32)
    out1 = mechanistic_model_stochastic(x1, params, x_dim=X_DIM)
    out1 = jax.block_until_ready(out1)
    ref1 = _reference(x1, params, x_dim=X_DIM)
    assert out1.shape == (B1, Y_DIM)
    assert jnp.allclose(out1, ref1, atol=1e-4, rtol=1e-4), "mismatch vs reference (pallas path)"

    # 2) Pallas path, forced multi-tile grid: B=300, tb_max=128 -> 3 steps of TB=128.
    B2 = 300
    x2 = jax.random.normal(jax.random.PRNGKey(7), (B2, D), jnp.float32)
    out2 = mechanistic_model_stochastic(x2, params, x_dim=X_DIM,
                                        tb_max=128, force_pallas=True)
    out2 = jax.block_until_ready(out2)
    ref2 = _reference(x2, params, x_dim=X_DIM)
    assert out2.shape == (B2, Y_DIM)
    assert jnp.allclose(out2, ref2, atol=1e-4, rtol=1e-4), "mismatch vs reference (tiled path)"

    # 3) Small-batch bypass path (plain XLA): B=8.
    B3 = 8
    x3 = jax.random.normal(jax.random.PRNGKey(3), (B3, D), jnp.float32)
    out3 = mechanistic_model_stochastic(x3, params, x_dim=X_DIM)
    out3 = jax.block_until_ready(out3)
    ref3 = _reference(x3, params, x_dim=X_DIM)
    assert out3.shape == (B3, Y_DIM)
    assert jnp.allclose(out3, ref3, atol=1e-4, rtol=1e-4), "mismatch vs reference (bypass path)"

    # TODO(synk): MM / X_N / Y_N / noise_N are injected callables in the original
    # module; they are instantiated here as affine normalizers + a small tanh MLP.
    print("KERNEL_OK")
</pallas_src>

<mosaic_0001>
module attributes {stable_mosaic.version = 11 : i64} {
  func.func @_mm_stochastic_kernel(%arg0: i32, %arg1: memref<32x384xf32, #tpu.memory_space<vmem>>, %arg2: memref<32x32xf32, #tpu.memory_space<vmem>>, %arg3: memref<32x1xf32, #tpu.memory_space<vmem>>, %arg4: memref<8x32xf32, #tpu.memory_space<vmem>>, %arg5: memref<8x1xf32, #tpu.memory_space<vmem>>, %arg6: memref<8x384xf32, #tpu.memory_space<vmem>>) attributes {dimension_semantics = [#tpu.dimension_semantics<parallel>], iteration_bounds = array<i64: 2>, scalar_prefetch = 0 : i64, scratch_operands = 0 : i64, tpu.core_type = #tpu.core_type<tc>, window_params = [{transform_indices = @transform_0, window_bounds = array<i64: 32, 384>}, {pipeline_mode = #tpu.pipeline_mode<synchronous>, transform_indices = @transform_1, window_bounds = array<i64: 32, 32>}, {pipeline_mode = #tpu.pipeline_mode<synchronous>, transform_indices = @transform_2, window_bounds = array<i64: 32, 1>}, {pipeline_mode = #tpu.pipeline_mode<synchronous>, transform_indices = @transform_3, window_bounds = array<i64: 8, 32>}, {pipeline_mode = #tpu.pipeline_mode<synchronous>, transform_indices = @transform_4, window_bounds = array<i64: 8, 1>}, {transform_indices = @transform_5, window_bounds = array<i64: 8, 384>}]} {
    %c0 = arith.constant 0 : index
    %c0_0 = arith.constant 0 : index
    %0 = vector.load %arg2[%c0, %c0_0] : memref<32x32xf32, #tpu.memory_space<vmem>>, vector<32x32xf32>
    %c0_1 = arith.constant 0 : index
    %c0_2 = arith.constant 0 : index
    %1 = vector.load %arg1[%c0_1, %c0_2] : memref<32x384xf32, #tpu.memory_space<vmem>>, vector<32x384xf32>
    %cst = arith.constant dense<0.000000e+00> : vector<32x384xf32>
    %2 = tpu.matmul %0, %1, %cst {dimension_numbers = #tpu.dot_dimension_numbers<[1], [0], [0], [1], [0, 0, 1, 1], [], []>} : vector<32x32xf32>, vector<32x384xf32>, vector<32x384xf32> -> vector<32x384xf32>
    %c0_3 = arith.constant 0 : index
    %c0_4 = arith.constant 0 : index
    %3 = vector.load %arg3[%c0_3, %c0_4] : memref<32x1xf32, #tpu.memory_space<vmem>>, vector<32x1xf32>
    %4 = vector.broadcast %3 : vector<32x1xf32> to vector<32x384xf32>
    %5 = arith.addf %2, %4 : vector<32x384xf32>
    %6 = math.tanh %5 : vector<32x384xf32>
    %c0_5 = arith.constant 0 : index
    %c0_6 = arith.constant 0 : index
    %7 = vector.load %arg4[%c0_5, %c0_6] : memref<8x32xf32, #tpu.memory_space<vmem>>, vector<8x32xf32>
    %cst_7 = arith.constant dense<0.000000e+00> : vector<8x384xf32>
    %8 = tpu.matmul %7, %6, %cst_7 {dimension_numbers = #tpu.dot_dimension_numbers<[1], [0], [0], [1], [0, 0, 1, 1], [], []>} : vector<8x32xf32>, vector<32x384xf32>, vector<8x384xf32> -> vector<8x384xf32>
    %c0_8 = arith.constant 0 : index
    %c0_9 = arith.constant 0 : index
    %9 = vector.load %arg5[%c0_8, %c0_9] : memref<8x1xf32, #tpu.memory_space<vmem>>, vector<8x1xf32>
    %10 = vector.broadcast %9 : vector<8x1xf32> to vector<8x384xf32>
    %11 = arith.addf %8, %10 : vector<8x384xf32>
    %c0_10 = arith.constant 0 : index
    %c0_11 = arith.constant 0 : index
    %12 = vector.load %arg6[%c0_10, %c0_11] : memref<8x384xf32, #tpu.memory_space<vmem>>, vector<8x384xf32>
    tpu.vector_store %arg6[%c0_10, %c0_11], %11 {strides = array<i32>} : memref<8x384xf32, #tpu.memory_space<vmem>>, vector<8x384xf32>,
    return
  }
  func.func @transform_0(%arg0: i32) -> (i32, i32) {
    %c0_i32 = arith.constant 0 : i32
    %c0_i32_0 = arith.constant 0 : i32
    return %c0_i32, %arg0 : i32, i32
  }
  func.func @transform_1(%arg0: i32) -> (i32, i32) {
    %c0_i32 = arith.constant 0 : i32
    %c0_i32_0 = arith.constant 0 : i32
    %c0_i32_1 = arith.constant 0 : i32
    return %c0_i32, %c0_i32_0 : i32, i32
  }
  func.func @transform_2(%arg0: i32) -> (i32, i32) {
    %c0_i32 = arith.constant 0 : i32
    %c0_i32_0 = arith.constant 0 : i32
    %c0_i32_1 = arith.constant 0 : i32
    return %c0_i32, %c0_i32_0 : i32, i32
  }
  func.func @transform_3(%arg0: i32) -> (i32, i32) {
    %c0_i32 = arith.constant 0 : i32
    %c0_i32_0 = arith.constant 0 : i32
    %c0_i32_1 = arith.constant 0 : i32
    return %c0_i32, %c0_i32_0 : i32, i32
  }
  func.func @transform_4(%arg0: i32) -> (i32, i32) {
    %c0_i32 = arith.constant 0 : i32
    %c0_i32_0 = arith.constant 0 : i32
    %c0_i32_1 = arith.constant 0 : i32
    return %c0_i32, %c0_i32_0 : i32, i32
  }
  func.func @transform_5(%arg0: i32) -> (i32, i32) {
    %c0_i32 = arith.constant 0 : i32
    %c0_i32_0 = arith.constant 0 : i32
    return %c0_i32, %arg0 : i32, i32
  }
}

</mosaic_0001>

<llo_original>
// kernel: tpu_custom_call.1
$region0: #{tpu_custom_call.1}
  #allocation0 [shape = 'u32[]', space=smem, size = 0x4, offset = 0x4, fixed_abs, tag = 'smem constant byte address 0x4 - core index']
  #allocation1 [shape = 'u32[144,128]{1,0:T(1,128)}', space=vmem, size = 0x12000, scoped, tag = 'internal scratch']
  %s0 = inlined_call_operand.hbm [shape: f32[32,768], index: 0, kind: input, shape index: {}]
  %s1 = inlined_call_operand.vmem [shape: f32[32,32], index: 1, kind: input, shape index: {}]
  %s2 = inlined_call_operand.vmem [shape: f32[32,1], index: 2, kind: input, shape index: {}]
  %s3 = inlined_call_operand.vmem [shape: f32[8,32], index: 3, kind: input, shape index: {}]
  %s4 = inlined_call_operand.vmem [shape: f32[8,1], index: 4, kind: input, shape index: {}]
  %s5 = inlined_call_operand.hbm [shape: f32[8,768], index: 5, kind: output, shape index: {}]
  %s6 = sld [smem:[#allocation0]]
  $region57: #{tpu_custom_call.1} parent=0
    _
  %s8 = ssub.s32 1, %s6
  %s9 = scalar_select 0, %s8, %s6
  $region1: #{tpu_custom_call.1} parent=0
    #allocation2 [shape = 'u8[98304]{0}', space=vmem, size = 0x18000, scoped, tag = 'input window, operand 0']
    #allocation3 [shape = 's32[2]{0}', space=sflag, size = 0x8, scoped, tag = 'scoped memory for tpu_custom_call.1']
    #allocation4 [shape = 's32[2]{0}', space=sflag, size = 0x8, scoped, tag = 'scoped memory for tpu_custom_call.1']
    #allocation5 [shape = 'u8[24576]{0}', space=vmem, size = 0x6000, scoped, tag = 'output window, operand 0']
    %10 = vsyncpa [#allocation3], 0
    %s11 = scalar_lea.sflag [#allocation3], 1
    %12 = vsyncpa %s11, 0
    %13 = vsyncpa [#allocation4], 0
    %s14 = scalar_lea.sflag [#allocation4], 1
    %15 = vsyncpa %s14, 0
    loop: start=0, step=1, limit=4
    $region2: #{tpu_custom_call.1} parent=1 // loop_pre_header
      _
    $region3: #{tpu_custom_call.1} parent=1 // loop_header
      %s17 = sphi 0, %s21
      %p18 = scmp.ge.s32.totalorder %s17, 4
      %s27 = sphi 0, %s29
      %s30 = sphi 0, %s27
      %s31 = sphi 0, %s30
      %s47 = sphi 0, %s31
      %s51 = sphi 0, %s51
      %s53 = sphi 0, %s51
      %s54 = sphi 0, %s53
      %s68 = sphi 0, %s54
      %s72 = sphi 0, %s72
      %s74 = sphi 0, %s72
      %s75 = sphi 0, %s74
      %s89 = sphi 0, %s75
      %s93 = sphi 0, %s93
      %s95 = sphi 0, %s93
      %s96 = sphi 0, %s95
      %s110 = sphi 0, %s96
      %s114 = sphi 0, %s114
      %s116 = sphi 0, %s114
      %s117 = sphi 0, %s116
      %s131 = sphi 0, %s117
      %s137 = sphi 0, %s139
      %s140 = sphi 0, %s137
      %s141 = sphi 0, %s140
      %s157 = sphi 0, %s141
    $region4: #{tpu_custom_call.1} parent=1 // loop_header_branch
      %20 = sbr.rel (%p18) target = $region8
    $region5: #{tpu_custom_call.1} parent=1 // loop_body
      %s22 = ssub.s32 %s17, 1
      %s23 = ssub.s32 %s17, 2
      %s24 = sadd.s32 %s17, 1
      %s25 = ssub.s32 %s17, %s24
      %p26 = scmp.eq.s32.totalorder %s25, 0
      %s28 = sadd.s32 %s27, 1
      %s29 = scalar_select %p26, %s27, %s28
      %p32 = pneg %p26
      %p33 = scmp.eq.s32.totalorder %s17, 1
      %p34 = por %p32, %p33
      %p35 = scmp.ne.s32.totalorder %s27, %s30
      %p36 = scmp.eq.s32.totalorder %s17, 0
      %p37 = por %p35, %p36
      %p38 = scmp.ne.s32.totalorder %s27, %s30
      %p39 = scmp.eq.s32.totalorder %s22, 1
      %p40 = por %p38, %p39
      %p41 = scmp.ne.s32.totalorder %s30, %s31
      %p42 = scmp.eq.s32.totalorder %s22, 0
      %p43 = por %p41, %p42
      %p44 = scmp.ne.s32.totalorder %s30, %s31
      %p45 = scmp.eq.s32.totalorder %s23, 1
      %p46 = por %p44, %p45
      %p48 = scmp.ne.s32.totalorder %s31, %s47
      %p49 = scmp.eq.s32.totalorder %s23, 0
      %p50 = por %p48, %p49
      %s52 = sadd.s32 %s51, 1
      %p55 = scmp.eq.s32.totalorder %s17, 1
      %p56 = scmp.ne.s32.totalorder %s51, %s53
      %p57 = scmp.eq.s32.totalorder %s17, 0
      %p58 = por %p56, %p57
      %p59 = scmp.ne.s32.totalorder %s51, %s53
      %p60 = scmp.eq.s32.totalorder %s22, 1
      %p61 = por %p59, %p60
      %p62 = scmp.ne.s32.totalorder %s53, %s54
      %p63 = scmp.eq.s32.totalorder %s22, 0
      %p64 = por %p62, %p63
      %p65 = scmp.ne.s32.totalorder %s53, %s54
      %p66 = scmp.eq.s32.totalorder %s23, 1
      %p67 = por %p65, %p66
      %p69 = scmp.ne.s32.totalorder %s54, %s68
      %p70 = scmp.eq.s32.totalorder %s23, 0
      %p71 = por %p69, %p70
      %s73 = sadd.s32 %s72, 1
      %p76 = scmp.eq.s32.totalorder %s17, 1
      %p77 = scmp.ne.s32.totalorder %s72, %s74
      %p78 = scmp.eq.s32.totalorder %s17, 0
      %p79 = por %p77, %p78
      %p80 = scmp.ne.s32.totalorder %s72, %s74
      %p81 = scmp.eq.s32.totalorder %s22, 1
      %p82 = por %p80, %p81
      %p83 = scmp.ne.s32.totalorder %s74, %s75
      %p84 = scmp.eq.s32.totalorder %s22, 0
      %p85 = por %p83, %p84
      %p86 = scmp.ne.s32.totalorder %s74, %s75
      %p87 = scmp.eq.s32.totalorder %s23, 1
      %p88 = por %p86, %p87
      %p90 = scmp.ne.s32.totalorder %s75, %s89
      %p91 = scmp.eq.s32.totalorder %s23, 0
      %p92 = por %p90, %p91
      %s94 = sadd.s32 %s93, 1
      %p97 = scmp.eq.s32.totalorder %s17, 1
      %p98 = scmp.ne.s32.totalorder %s93, %s95
      %p99 = scmp.eq.s32.totalorder %s17, 0
      %p100 = por %p98, %p99
      %p101 = scmp.ne.s32.totalorder %s93, %s95
      %p102 = scmp.eq.s32.totalorder %s22, 1
      %p103 = por %p101, %p102
      %p104 = scmp.ne.s32.totalorder %s95, %s96
      %p105 = scmp.eq.s32.totalorder %s22, 0
      %p106 = por %p104, %p105
      %p107 = scmp.ne.s32.totalorder %s95, %s96
      %p108 = scmp.eq.s32.totalorder %s23, 1
      %p109 = por %p107, %p108
      %p111 = scmp.ne.s32.totalorder %s96, %s110
      %p112 = scmp.eq.s32.totalorder %s23, 0
      %p113 = por %p111, %p112
      %s115 = sadd.s32 %s114, 1
      %p118 = scmp.eq.s32.totalorder %s17, 1
      %p119 = scmp.ne.s32.totalorder %s114, %s116
      %p120 = scmp.eq.s32.totalorder %s17, 0
      %p121 = por %p119, %p120
      %p122 = scmp.ne.s32.totalorder %s114, %s116
      %p123 = scmp.eq.s32.totalorder %s22, 1
      %p124 = por %p122, %p123
      %p125 = scmp.ne.s32.totalorder %s116, %s117
      %p126 = scmp.eq.s32.totalorder %s22, 0
      %p127 = por %p125, %p126
      %p128 = scmp.ne.s32.totalorder %s116, %s117
      %p129 = scmp.eq.s32.totalorder %s23, 1
      %p130 = por %p128, %p129
      %p132 = scmp.ne.s32.totalorder %s117, %s131
      %p133 = scmp.eq.s32.totalorder %s23, 0
      %p134 = por %p132, %p133
      %s135 = ssub.s32 %s17, %s24
      %p136 = scmp.eq.s32.totalorder %s135, 0
      %s138 = sadd.s32 %s137, 1
      %s139 = scalar_select %p136, %s137, %s138
      %p142 = pneg %p136
      %p143 = scmp.eq.s32.totalorder %s17, 1
      %p144 = por %p142, %p143
      %p145 = scmp.ne.s32.totalorder %s137, %s140
      %p146 = scmp.eq.s32.totalorder %s17, 0
      %p147 = por %p145, %p146
      %p148 = scmp.ne.s32.totalorder %s137, %s140
      %p149 = scmp.eq.s32.totalorder %s22, 1
      %p150 = por %p148, %p149
      %p151 = scmp.ne.s32.totalorder %s140, %s141
      %p152 = scmp.eq.s32.totalorder %s22, 0
      %p153 = por %p151, %p152
      %p154 = scmp.ne.s32.totalorder %s140, %s141
      %p155 = scmp.eq.s32.totalorder %s23, 1
      %p156 = por %p154, %p155
      %p158 = scmp.ne.s32.totalorder %s141, %s157
      %p159 = scmp.eq.s32.totalorder %s23, 0
      %p160 = por %p158, %p159
      %p161 = scmp.le.s32.totalorder 1, %s17
      %p162 = scmp.lt.s32.totalorder %s17, 3
      %p163 = pnand %p161, %p162
      %p164 = pneg %p163
      // Predicated region
      $region9: #{tpu_custom_call.1} parent=5 // pred_check
        _
      $region10: #{tpu_custom_call.1} parent=5 // pred_check_branch
        %166 = sbr.rel (%p163) target = $region12
      $region11: #{tpu_custom_call.1} parent=5 // pred_region
        %s167 = ssub.s32 %s17, 1
        // Predicated region
        $region13: #{tpu_custom_call.1} parent=11 // pred_check
          %p168 = pneg %p64
        $region14: #{tpu_custom_call.1} parent=11 // pred_check_branch
          %170 = sbr.rel (%p168) target = $region16
        $region15: #{tpu_custom_call.1} parent=11 // pred_region
          _
        $region16: #{tpu_custom_call.1} parent=11 // pred_fallthru
          _
        // Predicated region
        $region17: #{tpu_custom_call.1} parent=11 // pred_check
          %p171 = pneg %p85
        $region18: #{tpu_custom_call.1} parent=11 // pred_check_branch
          %173 = sbr.rel (%p171) target = $region20
        $region19: #{tpu_custom_call.1} parent=11 // pred_region
          _
        $region20: #{tpu_custom_call.1} parent=11 // pred_fallthru
          _
        // Predicated region
        $region21: #{tpu_custom_call.1} parent=11 // pred_check
          %p174 = pneg %p106
        $region22: #{tpu_custom_call.1} parent=11 // pred_check_branch
          %176 = sbr.rel (%p174) target = $region24
        $region23: #{tpu_custom_call.1} parent=11 // pred_region
          _
        $region24: #{tpu_custom_call.1} parent=11 // pred_fallthru
          _
        // Predicated region
        $region25: #{tpu_custom_call.1} parent=11 // pred_check
          %p177 = pneg %p127
        $region26: #{tpu_custom_call.1} parent=11 // pred_check_branch
          %179 = sbr.rel (%p177) target = $region28
        $region27: #{tpu_custom_call.1} parent=11 // pred_region
          _
        $region28: #{tpu_custom_call.1} parent=11 // pred_fallthru
          _
      $region12: #{tpu_custom_call.1} parent=5 // pred_fallthru
        _
      %p180 = scmp.lt.s32.totalorder %s17, 2
      // Predicated region
      $region29: #{tpu_custom_call.1} parent=5 // pred_check
        %p181 = pneg %p180
      $region30: #{tpu_custom_call.1} parent=5 // pred_check_branch
        %183 = sbr.rel (%p181) target = $region32
      $region31: #{tpu_custom_call.1} parent=5 // pred_region
        // Predicated region
        $region33: #{tpu_custom_call.1} parent=31 // pred_check
          %p184 = pneg %p37
        $region34: #{tpu_custom_call.1} parent=31 // pred_check_branch
          %186 = sbr.rel (%p184) target = $region36
        $region35: #{tpu_custom_call.1} parent=31 // pred_region
          %s187 = sand.u32 %s27, 1
          %s188 = scalar_lea.sflag [#allocation3], %s187
          %s189 = sand.u32 %s27, 1
          %s190 = smul.addr %s189, 96
          %s191 = scalar_lea.vmem [#allocation2], %s190
          %s192 = smul.u32 3, %s17
          %s194 = ssub.s32 1536, 1536
          %195 = vsyncadd %s188, %s194
          %s196 = smul.addr %s192, 128
          %s197 = scalar_lea.hbm %s0, %s196
          %s198 = sshll.u32 %s191, 4
          %s199 = int_to_ptr.vmem [resolvable:$true] %s198
          %204 = dma.hbm_to_vmem [thread:$0]  %s197, 1536, %s199, %s188, 768, 384, 24
        $region36: #{tpu_custom_call.1} parent=31 // pred_fallthru
          _
      $region32: #{tpu_custom_call.1} parent=5 // pred_fallthru
        _
      %p205 = scmp.le.s32.totalorder 1, %s17
      %p206 = scmp.lt.s32.totalorder %s17, 3
      %p207 = pnand %p205, %p206
      %p208 = pneg %p207
      // Predicated region
      $region37: #{tpu_custom_call.1} parent=5 // pred_check
        _
      $region38: #{tpu_custom_call.1} parent=5 // pred_check_branch
        %210 = sbr.rel (%p207) target = $region40
      $region39: #{tpu_custom_call.1} parent=5 // pred_region
        %s211 = ssub.s32 %s17, 1
        %s212 = sand.u32 %s30, 1
        %s213 = scalar_lea.sflag [#allocation3], %s212
        %s214 = sand.u32 %s30, 1
        %s215 = smul.addr %s214, 96
        %s216 = scalar_lea.vmem [#allocation2], %s215
        // Predicated region
        $region41: #{tpu_custom_call.1} parent=39 // pred_check
          %p217 = pneg %p43
        $region42: #{tpu_custom_call.1} parent=39 // pred_check_branch
          %219 = sbr.rel (%p217) target = $region44
        $region43: #{tpu_custom_call.1} parent=39 // pred_region
          %220 = dma.done %s213, 1536
        $region44: #{tpu_custom_call.1} parent=39 // pred_fallthru
          _
        %s221 = sand.u32 %s30, 1
        %s222 = scalar_lea.sflag [#allocation3], %s221
        %s223 = sand.u32 %s30, 1
        %s224 = smul.addr %s223, 96
        %s225 = scalar_lea.vmem [#allocation2], %s224
        %p226 = pneg %p43
        %p227 = pneg %p40
        %p228 = pneg %p64
        %p229 = pneg %p61
        %p230 = pneg %p85
        %p231 = pneg %p82
        %p232 = pneg %p106
        %p233 = pneg %p103
        %p234 = pneg %p127
        %p235 = pneg %p124
        %p236 = pneg %p153
        %p237 = pneg %p150
        %s238 = sand.u32 %s140, 1
        %s239 = scalar_lea.sflag [#allocation4], %s238
        %s240 = sand.u32 %s140, 1
        %s241 = smul.addr %s240, 24
        %s242 = scalar_lea.vmem [#allocation5], %s241
        %s243 = smul.u32 3, %s22
        %s244 = smul.u32 3, %s22
        %v245 = vld [vmem:[%s1] sm:$0xff]
        %v246 = vld [vmem:[%s1 + $0x8] sm:$0xff]
        %v247 = vld [vmem:[%s1 + $0x10] sm:$0xff]
        %v248 = vld [vmem:[%s1 + $0x18] sm:$0xff]
        %v249 = vld [vmem:[%s216] sm:$0xff]
        %v250 = vld [vmem:[%s216 + $0x8] sm:$0xff]
        %v251 = vld [vmem:[%s216 + $0x10] sm:$0xff]
        %v252 = vld [vmem:[%s216 + $0x18] sm:$0xff]
        %v253 = vld [vmem:[%s216 + $0x20] sm:$0xff]
        %v254 = vld [vmem:[%s216 + $0x28] sm:$0xff]
        %v255 = vld [vmem:[%s216 + $0x30] sm:$0xff]
        %v256 = vld [vmem:[%s216 + $0x38] sm:$0xff]
        %v257 = vld [vmem:[%s216 + $0x40] sm:$0xff]
        %v258 = vld [vmem:[%s216 + $0x48] sm:$0xff]
        %v259 = vld [vmem:[%s216 + $0x50] sm:$0xff]
        %v260 = vld [vmem:[%s216 + $0x58] sm:$0xff]
        %v261 = vld [vmem:[%s2] sm:$0xff]
        %v262 = vld [vmem:[%s2 + $0x8] sm:$0xff]
        %v263 = vld [vmem:[%s2 + $0x10] sm:$0xff]
        %v264 = vld [vmem:[%s2 + $0x18] sm:$0xff]
        %266 = vset.pattern.permute.xlu0 0
        %267 = vperm.xlu0 %266, %v261
        %v268 = vpop.permute.xlu0 %267
        %271 = vset.pattern.permute.xlu0 0
        %272 = vperm.xlu0 %271, %v262
        %v273 = vpop.permute.xlu0 %272
        %276 = vset.pattern.permute.xlu0 0
        %277 = vperm.xlu0 %276, %v263
        %v278 = vpop.permute.xlu0 %277
        %281 = vset.pattern.permute.xlu0 0
        %282 = vperm.xlu0 %281, %v264
        %v283 = vpop.permute.xlu0 %282
        %vm285 = vcmask 261120
        %v287 = vsel %vm285, %v245, 0
        %v290 = vsel %vm285, %v246, 0
        %v293 = vsel %vm285, %v247, 0
        %v296 = vsel %vm285, %v248, 0
        %298 = vmatprep.subr.mxu0 0.0
        %299 = vmatpush1.msra.mxu0 0.0
        %300 = vmatprep.subr.mxu0 0.0
        %301 = vmatpush1.msra.mxu0 0.0
        %302 = vmatprep.subr.mxu0 0.0
        %303 = vmatpush1.msra.mxu0 0.0
        %304 = vmatprep.subr.mxu0 0.0
        %305 = vmatpush1.msra.mxu0 0.0
        %306 = vmatprep.subr.mxu0 0.0
        %307 = vmatpush1.msra.mxu0 0.0
        %308 = vmatprep.subr.mxu0 0.0
        %309 = vmatpush1.msra.mxu0 0.0
        %310 = vmatprep.subr.mxu0 0.0
        %311 = vmatpush1.msra.mxu0 0.0
        %312 = vmatprep.subr.mxu0 0.0
        %313 = vmatpush1.msra.mxu0 0.0
        %314 = vmatprep.subr.mxu0 0.0
        %315 = vmatpush1.msra.mxu0 0.0
        %316 = vmatprep.subr.mxu0 0.0
        %317 = vmatpush1.msra.mxu0 0.0
        %318 = vmatprep.subr.mxu0 0.0
        %319 = vmatpush1.msra.mxu0 0.0
        %320 = vmatprep.subr.mxu0 0.0
        %321 = vmatpush1.msra.mxu0 0.0
        %322 = vmatprep.subr.mxu0 %v259
        %323 = vmatpush1.msra.mxu0 %v258
        %324 = vmatprep.subr.mxu0 %v256
        %325 = vmatpush1.msra.mxu0 %v255
        %326 = vmatprep.subr.mxu0 %v253
        %327 = vmatpush1.msra.mxu0 %v252
        %328 = vmatprep.subr.mxu0 %v250
        %329 = vmatpush1.msra.mxu0 %v249
        %330 = vmatprep.subr.mxu0 0.0
        %331 = vmatpush2.msra.mxu0 0.0
        %332 = vmatprep.subr.mxu0 0.0
        %333 = vmatpush2.msra.mxu0 0.0
        %334 = vmatprep.subr.mxu0 0.0
        %335 = vmatpush2.msra.mxu0 0.0
        %336 = vmatprep.subr.mxu0 0.0
        %337 = vmatpush2.msra.mxu0 0.0
        %338 = vmatprep.subr.mxu0 0.0
        %339 = vmatpush2.msra.mxu0 0.0
        %340 = vmatprep.subr.mxu0 0.0
        %341 = vmatpush2.msra.mxu0 0.0
        %342 = vmatprep.subr.mxu0 0.0
        %343 = vmatpush2.msra.mxu0 0.0
        %344 = vmatprep.subr.mxu0 0.0
        %345 = vmatpush2.msra.mxu0 0.0
        %346 = vmatprep.subr.mxu0 0.0
        %347 = vmatpush2.msra.mxu0 0.0
        %348 = vmatprep.subr.mxu0 0.0
        %349 = vmatpush2.msra.mxu0 0.0
        %350 = vmatprep.subr.mxu0 0.0
        %351 = vmatpush2.msra.mxu0 0.0
        %352 = vmatprep.subr.mxu0 0.0
        %353 = vmatpush2.msra.mxu0 0.0
        %354 = vmatprep.subr.mxu0 0.0
        %355 = vmatpush2.msra.mxu0 0.0
        %356 = vmatprep.subr.mxu0 0.0
        %357 = vmatpush2.msra.mxu0 0.0
        %358 = vmatprep.subr.mxu0 0.0
        %359 = vmatpush2.msra.mxu0 0.0
        %360 = vmatprep.subr.mxu0 0.0
        %361 = vmatpush2.msra.mxu0 0.0
        %362 = vmatprep.mubr.f32.mxu0 0.0
        %363 = vmatmul.mubr.f32.gmra.mxu0 %v287
        %v364 = vpop.f32.mrf.mxu0
        %v365 = vadd.f32 %v268, %v364
        %v366 = vpop.f32.mrf.mxu0
        %v367 = vadd.f32 %v268, %v366
        %368 = vmatprep.mubr.f32.mxu0 0.0
        %369 = vmatmul.mubr.f32.gmra.mxu0 %v290
        %v370 = vpop.f32.mrf.mxu0
        %v371 = vadd.f32 %v273, %v370
        %v372 = vpop.f32.mrf.mxu0
        %v373 = vadd.f32 %v273, %v372
        %374 = vmatprep.mubr.f32.mxu0 0.0
        %375 = vmatmul.mubr.f32.gmra.mxu0 %v293
        %v376 = vpop.f32.mrf.mxu0
        %v377 = vadd.f32 %v278, %v376
        %v378 = vpop.f32.mrf.mxu0
        %v379 = vadd.f32 %v278, %v378
        %380 = vmatprep.mubr.f32.mxu0 0.0
        %381 = vmatmul.mubr.f32.gmra.mxu0 %v296
        %v382 = vpop.f32.mrf.mxu0
        %v383 = vadd.f32 %v283, %v382
        %v384 = vpop.f32.mrf.mxu0
        %v385 = vadd.f32 %v283, %v384
        %386 = vdwg.mxu0
        %387 = vmatprep.subr.mxu0 0.0
        %388 = vmatpush1.msra.mxu0 0.0
        %389 = vmatprep.subr.mxu0 0.0
        %390 = vmatpush1.msra.mxu0 0.0
        %391 = vmatprep.subr.mxu0 0.0
        %392 = vmatpush1.msra.mxu0 0.0
        %393 = vmatprep.subr.mxu0 0.0
        %394 = vmatpush1.msra.mxu0 0.0
        %395 = vmatprep.subr.mxu0 0.0
        %396 = vmatpush1.msra.mxu0 0.0
        %397 = vmatprep.subr.mxu0 0.0
        %398 = vmatpush1.msra.mxu0 0.0
        %399 = vmatprep.subr.mxu0 0.0
        %400 = vmatpush1.msra.mxu0 0.0
        %401 = vmatprep.subr.mxu0 0.0
        %402 = vmatpush1.msra.mxu0 0.0
        %403 = vmatprep.subr.mxu0 0.0
        %404 = vmatpush1.msra.mxu0 0.0
        %405 = vmatprep.subr.mxu0 0.0
        %406 = vmatpush1.msra.mxu0 0.0
        %407 = vmatprep.subr.mxu0 0.0
        %408 = vmatpush1.msra.mxu0 0.0
        %409 = vmatprep.subr.mxu0 0.0
        %410 = vmatpush1.msra.mxu0 0.0
        %411 = vmatprep.subr.mxu0 0.0
        %412 = vmatpush1.msra.mxu0 %v260
        %413 = vmatprep.subr.mxu0 0.0
        %414 = vmatpush1.msra.mxu0 %v257
        %415 = vmatprep.subr.mxu0 0.0
        %416 = vmatpush1.msra.mxu0 %v254
        %417 = vmatprep.subr.mxu0 0.0
        %418 = vmatpush1.msra.mxu0 %v251
        %419 = vmatprep.subr.mxu0 0.0
        %420 = vmatpush2.msra.mxu0 0.0
        %421 = vmatprep.subr.mxu0 0.0
        %422 = vmatpush2.msra.mxu0 0.0
        %423 = vmatprep.subr.mxu0 0.0
        %424 = vmatpush2.msra.mxu0 0.0
        %425 = vmatprep.subr.mxu0 0.0
        %426 = vmatpush2.msra.mxu0 0.0
        %427 = vmatprep.subr.mxu0 0.0
        %428 = vmatpush2.msra.mxu0 0.0
        %429 = vmatprep.subr.mxu0 0.0
        %430 = vmatpush2.msra.mxu0 0.0
        %431 = vmatprep.subr.mxu0 0.0
        %432 = vmatpush2.msra.mxu0 0.0
        %433 = vmatprep.subr.mxu0 0.0
        %434 = vmatpush2.msra.mxu0 0.0
        %435 = vmatprep.subr.mxu0 0.0
        %436 = vmatpush2.msra.mxu0 0.0
        %437 = vmatprep.subr.mxu0 0.0
        %438 = vmatpush2.msra.mxu0 0.0
        %439 = vmatprep.subr.mxu0 0.0
        %440 = vmatpush2.msra.mxu0 0.0
        %441 = vmatprep.subr.mxu0 0.0
        %442 = vmatpush2.msra.mxu0 0.0
        %443 = vmatprep.subr.mxu0 0.0
        %444 = vmatpush2.msra.mxu0 0.0
        %445 = vmatprep.subr.mxu0 0.0
        %446 = vmatpush2.msra.mxu0 0.0
        %447 = vmatprep.subr.mxu0 0.0
        %448 = vmatpush2.msra.mxu0 0.0
        %449 = vmatprep.subr.mxu0 0.0
        %450 = vmatpush2.msra.mxu0 0.0
        %451 = vmatprep.mubr.f32.mxu0 0.0
        %452 = vmatmul.mubr.f32.gmra.mxu0 %v287
        %v453 = vpop.f32.mrf.mxu0
        %v454 = vadd.f32 %v268, %v453
        %v455 = vpop.f32.mrf.mxu0
        %456 = vmatprep.mubr.f32.mxu0 0.0
        %457 = vmatmul.mubr.f32.gmra.mxu0 %v290
        %v458 = vpop.f32.mrf.mxu0
        %v459 = vadd.f32 %v273, %v458
        %v460 = vpop.f32.mrf.mxu0
        %461 = vmatprep.mubr.f32.mxu0 0.0
        %462 = vmatmul.mubr.f32.gmra.mxu0 %v293
        %v463 = vpop.f32.mrf.mxu0
        %v464 = vadd.f32 %v278, %v463
        %v465 = vpop.f32.mrf.mxu0
        %466 = vmatprep.mubr.f32.mxu0 0.0
        %467 = vmatmul.mubr.f32.gmra.mxu0 %v296
        %v468 = vpop.f32.mrf.mxu0
        %v469 = vadd.f32 %v283, %v468
        %v470 = vpop.f32.mrf.mxu0
        %471 = vdwg.mxu0
        %v472 = vtanh.pop %v365
        %v473 = vtanh.pop %v367
        %v474 = vtanh.pop %v454
        %v475 = vtanh.pop %v371
        %v476 = vtanh.pop %v373
        %v477 = vtanh.pop %v459
        %v478 = vtanh.pop %v377
        %v479 = vtanh.pop %v379
        %v480 = vtanh.pop %v464
        %v481 = vtanh.pop %v383
        %v482 = vtanh.pop %v385
        %v483 = vtanh.pop %v469
        %v484 = vld [vmem:[%s3] sm:$0xff]
        %v485 = vld [vmem:[%s4] sm:$0xff]
        %487 = vset.pattern.permute.xlu0 0
        %488 = vperm.xlu0 %487, %v485
        %v489 = vpop.permute.xlu0 %488
        %v492 = vsel %vm285, %v484, 0
        %494 = vmatprep.subr.mxu0 0.0
        %495 = vmatpush1.msra.mxu0 0.0
        %496 = vmatprep.subr.mxu0 0.0
        %497 = vmatpush1.msra.mxu0 0.0
        %498 = vmatprep.subr.mxu0 0.0
        %499 = vmatpush1.msra.mxu0 0.0
        %500 = vmatprep.subr.mxu0 0.0
        %501 = vmatpush1.msra.mxu0 0.0
        %502 = vmatprep.subr.mxu0 0.0
        %503 = vmatpush1.msra.mxu0 0.0
        %504 = vmatprep.subr.mxu0 0.0
        %505 = vmatpush1.msra.mxu0 0.0
        %506 = vmatprep.subr.mxu0 0.0
        %507 = vmatpush1.msra.mxu0 0.0
        %508 = vmatprep.subr.mxu0 0.0
        %509 = vmatpush1.msra.mxu0 0.0
        %510 = vmatprep.subr.mxu0 0.0
        %511 = vmatpush1.msra.mxu0 0.0
        %512 = vmatprep.subr.mxu0 0.0
        %513 = vmatpush1.msra.mxu0 0.0
        %514 = vmatprep.subr.mxu0 0.0
        %515 = vmatpush1.msra.mxu0 0.0
        %516 = vmatprep.subr.mxu0 0.0
        %517 = vmatpush1.msra.mxu0 0.0
        %518 = vmatprep.subr.mxu0 %v482
        %519 = vmatpush1.msra.mxu0 %v481
        %520 = vmatprep.subr.mxu0 %v479
        %521 = vmatpush1.msra.mxu0 %v478
        %522 = vmatprep.subr.mxu0 %v476
        %523 = vmatpush1.msra.mxu0 %v475
        %524 = vmatprep.subr.mxu0 %v473
        %525 = vmatpush1.msra.mxu0 %v472
        %526 = vmatprep.subr.mxu0 0.0
        %527 = vmatpush2.msra.mxu0 0.0
        %528 = vmatprep.subr.mxu0 0.0
        %529 = vmatpush2.msra.mxu0 0.0
        %530 = vmatprep.subr.mxu0 0.0
        %531 = vmatpush2.msra.mxu0 0.0
        %532 = vmatprep.subr.mxu0 0.0
        %533 = vmatpush2.msra.mxu0 0.0
        %534 = vmatprep.subr.mxu0 0.0
        %535 = vmatpush2.msra.mxu0 0.0
        %536 = vmatprep.subr.mxu0 0.0
        %537 = vmatpush2.msra.mxu0 0.0
        %538 = vmatprep.subr.mxu0 0.0
        %539 = vmatpush2.msra.mxu0 0.0
        %540 = vmatprep.subr.mxu0 0.0
        %541 = vmatpush2.msra.mxu0 0.0
        %542 = vmatprep.subr.mxu0 0.0
        %543 = vmatpush2.msra.mxu0 0.0
        %544 = vmatprep.subr.mxu0 0.0
        %545 = vmatpush2.msra.mxu0 0.0
        %546 = vmatprep.subr.mxu0 0.0
        %547 = vmatpush2.msra.mxu0 0.0
        %548 = vmatprep.subr.mxu0 0.0
        %549 = vmatpush2.msra.mxu0 0.0
        %550 = vmatprep.subr.mxu0 0.0
        %551 = vmatpush2.msra.mxu0 0.0
        %552 = vmatprep.subr.mxu0 0.0
        %553 = vmatpush2.msra.mxu0 0.0
        %554 = vmatprep.subr.mxu0 0.0
        %555 = vmatpush2.msra.mxu0 0.0
        %556 = vmatprep.subr.mxu0 0.0
        %557 = vmatpush2.msra.mxu0 0.0
        %558 = vmatprep.mubr.f32.mxu0 0.0
        %559 = vmatmul.mubr.f32.gmra.mxu0 %v492
        %v560 = vpop.f32.mrf.mxu0
        %v561 = vadd.f32 %v489, %v560
        %v562 = vpop.f32.mrf.mxu0
        %v563 = vadd.f32 %v489, %v562
        %564 = vdwg.mxu0
        %565 = vmatprep.subr.mxu0 0.0
        %566 = vmatpush1.msra.mxu0 0.0
        %567 = vmatprep.subr.mxu0 0.0
        %568 = vmatpush1.msra.mxu0 0.0
        %569 = vmatprep.subr.mxu0 0.0
        %570 = vmatpush1.msra.mxu0 0.0
        %571 = vmatprep.subr.mxu0 0.0
        %572 = vmatpush1.msra.mxu0 0.0
        %573 = vmatprep.subr.mxu0 0.0
        %574 = vmatpush1.msra.mxu0 0.0
        %575 = vmatprep.subr.mxu0 0.0
        %576 = vmatpush1.msra.mxu0 0.0
        %577 = vmatprep.subr.mxu0 0.0
        %578 = vmatpush1.msra.mxu0 0.0
        %579 = vmatprep.subr.mxu0 0.0
        %580 = vmatpush1.msra.mxu0 0.0
        %581 = vmatprep.subr.mxu0 0.0
        %582 = vmatpush1.msra.mxu0 0.0
        %583 = vmatprep.subr.mxu0 0.0
        %584 = vmatpush1.msra.mxu0 0.0
        %585 = vmatprep.subr.mxu0 0.0
        %586 = vmatpush1.msra.mxu0 0.0
        %587 = vmatprep.subr.mxu0 0.0
        %588 = vmatpush1.msra.mxu0 0.0
        %589 = vmatprep.subr.mxu0 0.0
        %590 = vmatpush1.msra.mxu0 %v483
        %591 = vmatprep.subr.mxu0 0.0
        %592 = vmatpush1.msra.mxu0 %v480
        %593 = vmatprep.subr.mxu0 0.0
        %594 = vmatpush1.msra.mxu0 %v477
        %595 = vmatprep.subr.mxu0 0.0
        %596 = vmatpush1.msra.mxu0 %v474
        %597 = vmatprep.subr.mxu0 0.0
        %598 = vmatpush2.msra.mxu0 0.0
        %599 = vmatprep.subr.mxu0 0.0
        %600 = vmatpush2.msra.mxu0 0.0
        %601 = vmatprep.subr.mxu0 0.0
        %602 = vmatpush2.msra.mxu0 0.0
        %603 = vmatprep.subr.mxu0 0.0
        %604 = vmatpush2.msra.mxu0 0.0
        %605 = vmatprep.subr.mxu0 0.0
        %606 = vmatpush2.msra.mxu0 0.0
        %607 = vmatprep.subr.mxu0 0.0
        %608 = vmatpush2.msra.mxu0 0.0
        %609 = vmatprep.subr.mxu0 0.0
        %610 = vmatpush2.msra.mxu0 0.0
        %611 = vmatprep.subr.mxu0 0.0
        %612 = vmatpush2.msra.mxu0 0.0
        %613 = vmatprep.subr.mxu0 0.0
        %614 = vmatpush2.msra.mxu0 0.0
        %615 = vmatprep.subr.mxu0 0.0
        %616 = vmatpush2.msra.mxu0 0.0
        %617 = vmatprep.subr.mxu0 0.0
        %618 = vmatpush2.msra.mxu0 0.0
        %619 = vmatprep.subr.mxu0 0.0
        %620 = vmatpush2.msra.mxu0 0.0
        %621 = vmatprep.subr.mxu0 0.0
        %622 = vmatpush2.msra.mxu0 0.0
        %623 = vmatprep.subr.mxu0 0.0
        %624 = vmatpush2.msra.mxu0 0.0
        %625 = vmatprep.subr.mxu0 0.0
        %626 = vmatpush2.msra.mxu0 0.0
        %627 = vmatprep.subr.mxu0 0.0
        %628 = vmatpush2.msra.mxu0 0.0
        %629 = vmatprep.mubr.f32.mxu0 0.0
        %630 = vmatmul.mubr.f32.gmra.mxu0 %v492
        %v631 = vpop.f32.mrf.mxu0
        %v632 = vadd.f32 %v489, %v631
        %v633 = vpop.f32.mrf.mxu0
        %634 = vdwg.mxu0
        %635 = vst [vmem:[%s242] sm:$0xff] %v561
        %636 = vst [vmem:[%s242 + $0x8] sm:$0xff] %v563
        %637 = vst [vmem:[%s242 + $0x10] sm:$0xff] %v632
        %s638 = sand.u32 %s140, 1
        %s639 = scalar_lea.sflag [#allocation4], %s638
        %s640 = sand.u32 %s140, 1
        %s641 = smul.addr %s640, 24
        %s642 = scalar_lea.vmem [#allocation5], %s641
        // Predicated region
        $region45: #{tpu_custom_call.1} parent=39 // pred_check
          %p643 = pneg %p150
        $region46: #{tpu_custom_call.1} parent=39 // pred_check_branch
          %645 = sbr.rel (%p643) target = $region48
        $region47: #{tpu_custom_call.1} parent=39 // pred_region
          %s646 = smul.u32 3, %s22
          %s648 = ssub.s32 384, 384
          %649 = vsyncadd %s639, %s648
          %s650 = smul.addr %s646, 128
          %s651 = scalar_lea.hbm %s5, %s650
          %s653 = sshll.u32 %s642, 4
          %s654 = int_to_ptr.vmem [resolvable:$true] %s653
          %656 = dma.vmem_to_hbm [thread:$0]  %s654, 384, %s651, %s639
        $region48: #{tpu_custom_call.1} parent=39 // pred_fallthru
          _
      $region40: #{tpu_custom_call.1} parent=5 // pred_fallthru
        _
      %p657 = scmp.le.s32.totalorder 2, %s17
      // Predicated region
      $region49: #{tpu_custom_call.1} parent=5 // pred_check
        %p658 = pneg %p657
      $region50: #{tpu_custom_call.1} parent=5 // pred_check_branch
        %660 = sbr.rel (%p658) target = $region52
      $region51: #{tpu_custom_call.1} parent=5 // pred_region
        %s661 = ssub.s32 %s17, 2
        // Predicated region
        $region53: #{tpu_custom_call.1} parent=51 // pred_check
          %p662 = pneg %p156
        $region54: #{tpu_custom_call.1} parent=51 // pred_check_branch
          %664 = sbr.rel (%p662) target = $region56
        $region55: #{tpu_custom_call.1} parent=51 // pred_region
          %s665 = sand.u32 %s141, 1
          %s666 = scalar_lea.sflag [#allocation4], %s665
          %s667 = sand.u32 %s141, 1
          %s668 = smul.addr %s667, 24
          %s669 = scalar_lea.vmem [#allocation5], %s668
          %670 = dma.done %s666, 384
        $region56: #{tpu_custom_call.1} parent=51 // pred_fallthru
          _
      $region52: #{tpu_custom_call.1} parent=5 // pred_fallthru
        _
    $region6: #{tpu_custom_call.1} parent=1 // loop_footer
      %s21 = sadd.s32 1, %s17
    $region7: #{tpu_custom_call.1} parent=1 // loop_footer_branch
      %16 = sbr.rel target = $region3
    $region8: #{tpu_custom_call.1} parent=1 // loop_exit
      _
    %671 = vsyncpa [#allocation3], 1
    %s672 = scalar_lea.sflag [#allocation3], 1
    %673 = vsyncpa %s672, 1
    %674 = vsyncpa [#allocation4], 1
    %s675 = scalar_lea.sflag [#allocation4], 1
    %676 = vsyncpa %s675, 1

</llo_original>
